<compile_context>
chip_gen: v5e
topology: v5e:2x2
jax: 0.10.0
libtpu: 0.0.40
codegen_flags: <defaults>
</compile_context>

<pallas_src>
import jax
import jax.numpy as jnp
from jax.experimental import pallas as pl
from jax.experimental.pallas import tpu as pltpu

HIDDEN1 = 128
HIDDEN2 = 16
HIDDEN2_PAD = 128  # pad the 16-wide hidden dim to a native 128-lane width


def gp_mlp_kernel(x_ref, w1_ref, b1_ref, w2_ref, b2_ref, w3_ref, b3_ref, o_ref):
    # Fused 3-layer MLP on one batch tile: matmuls on the MXU (bf16 operands,
    # f32 accumulation), bias adds + sigmoids in f32 on the VPU/EUP.
    x = x_ref[...].astype(jnp.bfloat16)  # x arrives f32; cast in-kernel (free VPU slack)
    h1 = jnp.dot(x, w1_ref[...], preferred_element_type=jnp.float32) + b1_ref[...]
    h1 = jax.nn.sigmoid(h1)  # f32
    h2 = jnp.dot(h1.astype(jnp.bfloat16), w2_ref[...],
                 preferred_element_type=jnp.float32) + b2_ref[...]
    h2 = jax.nn.sigmoid(h2)  # f32; padded columns are sigmoid(0)=0.5
    y = jnp.dot(h2.astype(jnp.bfloat16), w3_ref[...],
                preferred_element_type=jnp.float32) + b3_ref[...]
    # Padded w3 rows are exactly zero, so the 0.5 activations contribute nothing.
    o_ref[...] = y.astype(o_ref.dtype)  # direct [tile, out_dim] store (no pad)


def _round_up(n, m):
    return ((n + m - 1) // m) * m


def _num_tensorcores_per_chip():
    # v7x has 2 TensorCores per chip; v5e/v6e have 1. Guarded: default to 1.
    try:
        kind = jax.devices()[0].device_kind.lower()
    except Exception:
        return 1
    return 2 if "v7" in kind else 1


def _choose_batch_tile(B, *, cap=1024):
    # Large tiles amortize the ~0.35us/step grid overhead. On single-TC chips
    # (v5e/v6e) prefer grid=1 when the batch fits under the cap. On v7x, keep a
    # balanced 2N-way split so both TensorCores get equal work.
    Bp = _round_up(B, 16)
    if _num_tensorcores_per_chip() >= 2 and Bp > 16:
        return min(cap, _round_up(pl.cdiv(Bp, 2), 16))
    return min(cap, Bp)


def gp_model_forward(x, params, *, batch_tile=None):
    """x: [B, input_size] float32. params: dict of (w1,b1,w2,b2,w3,b3)."""
    B, in_dim = x.shape
    w1 = params["w1"].astype(jnp.bfloat16)   # [in, 128]
    b1 = params["b1"].astype(jnp.float32)    # [1, 128]
    w2 = params["w2"].astype(jnp.bfloat16)   # [128, 16]
    b2 = params["b2"].astype(jnp.float32)    # [1, 16]
    w3 = params["w3"].astype(jnp.bfloat16)   # [16, out]
    b3 = params["b3"].astype(jnp.float32)    # [1, out]
    out_dim = w3.shape[1]

    # --- pad the 16-wide hidden dim to 128 (tiny, numerically exact) ---
    w2p = jnp.zeros((HIDDEN1, HIDDEN2_PAD), jnp.bfloat16).at[:, :HIDDEN2].set(w2)
    b2p = jnp.zeros((1, HIDDEN2_PAD), jnp.float32).at[:, :HIDDEN2].set(b2)
    w3p = jnp.zeros((HIDDEN2_PAD, out_dim), jnp.bfloat16).at[:HIDDEN2, :].set(w3)

    # --- batch tiling: no HBM padding of x; ragged last block is masked by Pallas ---
    tile = _choose_batch_tile(B) if batch_tile is None else batch_tile
    grid = (pl.cdiv(B, tile),)

    def repl(arr):
        # whole-array block, same block every grid step (constant index map ->
        # not re-DMA'd across steps)
        nd = arr.ndim
        return pl.BlockSpec(arr.shape, lambda i, _nd=nd: (0,) * _nd)

    y = pl.pallas_call(
        gp_mlp_kernel,
        out_shape=jax.ShapeDtypeStruct((B, out_dim), jnp.float32),
        grid_spec=pltpu.PrefetchScalarGridSpec(
            num_scalar_prefetch=0,
            grid=grid,
            in_specs=[
                pl.BlockSpec((tile, in_dim), lambda i: (i, 0)),  # x tile (f32)
                repl(w1), repl(b1),
                repl(w2p), repl(b2p),
                repl(w3p), repl(b3),
            ],
            out_specs=pl.BlockSpec((tile, out_dim), lambda i: (i, 0)),
        ),
        compiler_params=pltpu.CompilerParams(
            dimension_semantics=("parallel",),
        ),
    )(x, w1, b1, w2p, b2p, w3p, b3)

    return y


def init_params(key, input_size, output_size):
    """Deterministic synthetic parameters with nn.Linear-like shapes.

    PyTorch stores weight as [out, in]; we store the transpose [in, out].
    Weights are kept in bf16 (MXU fast path), biases in f32."""
    k1, k2, k3, k4, k5, k6 = jax.random.split(key, 6)

    def lin(kw, kb, fan_in, fan_out):
        bound = 1.0 / float(fan_in) ** 0.5
        w = jax.random.uniform(kw, (fan_in, fan_out), jnp.float32, -bound, bound)
        b = jax.random.uniform(kb, (1, fan_out), jnp.float32, -bound, bound)
        return w.astype(jnp.bfloat16), b

    w1, b1 = lin(k1, k2, input_size, HIDDEN1)
    w2, b2 = lin(k3, k4, HIDDEN1, HIDDEN2)
    w3, b3 = lin(k5, k6, HIDDEN2, output_size)
    return {"w1": w1, "b1": b1, "w2": w2, "b2": b2, "w3": w3, "b3": b3}


def reference_forward(x, params):
    # Same numerics as the kernel: bf16 matmul operands, f32 accumulation,
    # f32 sigmoid (uses the original, unpadded weights).
    xb = x.astype(jnp.bfloat16)
    h1 = jax.nn.sigmoid(
        jnp.dot(xb, params["w1"].astype(jnp.bfloat16),
                preferred_element_type=jnp.float32) + params["b1"])
    h2 = jax.nn.sigmoid(
        jnp.dot(h1.astype(jnp.bfloat16), params["w2"].astype(jnp.bfloat16),
                preferred_element_type=jnp.float32) + params["b2"])
    return jnp.dot(h2.astype(jnp.bfloat16), params["w3"].astype(jnp.bfloat16),
                   preferred_element_type=jnp.float32) + params["b3"]


if __name__ == "__main__":
    key = jax.random.PRNGKey(0)
    kx, kp = jax.random.split(key)

    batch = 64          # small demo batch; grid=1 on v5e/v6e, balanced 2-way on v7x
    input_size = 32
    output_size = 8     # GpModel(input_size, output_size, step_len) -> output features

    x = jax.random.normal(kx, (batch, input_size), dtype=jnp.float32)
    params = init_params(kp, input_size, output_size)

    y = gp_model_forward(x, params)
    y = jax.block_until_ready(y)

    y_ref = reference_forward(x, params)
    assert y.shape == (batch, output_size)
    assert jnp.allclose(y, y_ref, atol=2e-2, rtol=2e-2), "Pallas output mismatch vs reference"

    print("KERNEL_OK")
</pallas_src>

<mosaic_0001>
module attributes {stable_mosaic.version = 11 : i64} {
  func.func @gp_mlp_kernel(%arg0: i32, %arg1: memref<64x32xf32, #tpu.memory_space<vmem>>, %arg2: memref<32x128xbf16, #tpu.memory_space<vmem>>, %arg3: memref<1x128xf32, #tpu.memory_space<vmem>>, %arg4: memref<128x128xbf16, #tpu.memory_space<vmem>>, %arg5: memref<1x128xf32, #tpu.memory_space<vmem>>, %arg6: memref<128x8xbf16, #tpu.memory_space<vmem>>, %arg7: memref<1x8xf32, #tpu.memory_space<vmem>>, %arg8: memref<64x8xf32, #tpu.memory_space<vmem>>) attributes {dimension_semantics = [#tpu.dimension_semantics<parallel>], iteration_bounds = array<i64: 1>, scalar_prefetch = 0 : i64, scratch_operands = 0 : i64, tpu.core_type = #tpu.core_type<tc>, window_params = [{transform_indices = @transform_0, window_bounds = array<i64: 64, 32>}, {pipeline_mode = #tpu.pipeline_mode<synchronous>, transform_indices = @transform_1, window_bounds = array<i64: 32, 128>}, {pipeline_mode = #tpu.pipeline_mode<synchronous>, transform_indices = @transform_2, window_bounds = array<i64: 1, 128>}, {pipeline_mode = #tpu.pipeline_mode<synchronous>, transform_indices = @transform_3, window_bounds = array<i64: 128, 128>}, {pipeline_mode = #tpu.pipeline_mode<synchronous>, transform_indices = @transform_4, window_bounds = array<i64: 1, 128>}, {pipeline_mode = #tpu.pipeline_mode<synchronous>, transform_indices = @transform_5, window_bounds = array<i64: 128, 8>}, {pipeline_mode = #tpu.pipeline_mode<synchronous>, transform_indices = @transform_6, window_bounds = array<i64: 1, 8>}, {transform_indices = @transform_7, window_bounds = array<i64: 64, 8>}]} {
    %c0 = arith.constant 0 : index
    %c0_0 = arith.constant 0 : index
    %0 = vector.load %arg1[%c0, %c0_0] : memref<64x32xf32, #tpu.memory_space<vmem>>, vector<64x32xf32>
    %1 = arith.truncf %0 : vector<64x32xf32> to vector<64x32xbf16>
    %c0_1 = arith.constant 0 : index
    %c0_2 = arith.constant 0 : index
    %2 = vector.load %arg2[%c0_1, %c0_2] : memref<32x128xbf16, #tpu.memory_space<vmem>>, vector<32x128xbf16>
    %cst = arith.constant dense<0.000000e+00> : vector<64x128xf32>
    %3 = tpu.matmul %1, %2, %cst {dimension_numbers = #tpu.dot_dimension_numbers<[1], [0], [0], [1], [0, 0, 1, 1], [], []>} : vector<64x32xbf16>, vector<32x128xbf16>, vector<64x128xf32> -> vector<64x128xf32>
    %c0_3 = arith.constant 0 : index
    %c0_4 = arith.constant 0 : index
    %4 = vector.load %arg3[%c0_3, %c0_4] : memref<1x128xf32, #tpu.memory_space<vmem>>, vector<1x128xf32>
    %5 = vector.broadcast %4 : vector<1x128xf32> to vector<64x128xf32>
    %6 = arith.addf %3, %5 : vector<64x128xf32>
    %7 = arith.negf %6 : vector<64x128xf32>
    %8 = math.exp %7 : vector<64x128xf32>
    %cst_5 = arith.constant 1.000000e+00 : f32
    %9 = vector.broadcast %cst_5 : f32 to vector<64x128xf32>
    %10 = arith.addf %9, %8 : vector<64x128xf32>
    %11 = arith.divf %9, %10 : vector<64x128xf32>
    %12 = arith.truncf %11 : vector<64x128xf32> to vector<64x128xbf16>
    %c0_6 = arith.constant 0 : index
    %c0_7 = arith.constant 0 : index
    %13 = vector.load %arg4[%c0_6, %c0_7] : memref<128x128xbf16, #tpu.memory_space<vmem>>, vector<128x128xbf16>
    %cst_8 = arith.constant dense<0.000000e+00> : vector<64x128xf32>
    %14 = tpu.matmul %12, %13, %cst_8 {dimension_numbers = #tpu.dot_dimension_numbers<[1], [0], [0], [1], [0, 0, 1, 1], [], []>} : vector<64x128xbf16>, vector<128x128xbf16>, vector<64x128xf32> -> vector<64x128xf32>
    %c0_9 = arith.constant 0 : index
    %c0_10 = arith.constant 0 : index
    %15 = vector.load %arg5[%c0_9, %c0_10] : memref<1x128xf32, #tpu.memory_space<vmem>>, vector<1x128xf32>
    %16 = vector.broadcast %15 : vector<1x128xf32> to vector<64x128xf32>
    %17 = arith.addf %14, %16 : vector<64x128xf32>
    %18 = arith.negf %17 : vector<64x128xf32>
    %19 = math.exp %18 : vector<64x128xf32>
    %cst_11 = arith.constant 1.000000e+00 : f32
    %20 = vector.broadcast %cst_11 : f32 to vector<64x128xf32>
    %21 = arith.addf %20, %19 : vector<64x128xf32>
    %22 = arith.divf %20, %21 : vector<64x128xf32>
    %23 = arith.truncf %22 : vector<64x128xf32> to vector<64x128xbf16>
    %c0_12 = arith.constant 0 : index
    %c0_13 = arith.constant 0 : index
    %24 = vector.load %arg6[%c0_12, %c0_13] : memref<128x8xbf16, #tpu.memory_space<vmem>>, vector<128x8xbf16>
    %cst_14 = arith.constant dense<0.000000e+00> : vector<64x8xf32>
    %25 = tpu.matmul %23, %24, %cst_14 {dimension_numbers = #tpu.dot_dimension_numbers<[1], [0], [0], [1], [0, 0, 1, 1], [], []>} : vector<64x128xbf16>, vector<128x8xbf16>, vector<64x8xf32> -> vector<64x8xf32>
    %c0_15 = arith.constant 0 : index
    %c0_16 = arith.constant 0 : index
    %26 = vector.load %arg7[%c0_15, %c0_16] : memref<1x8xf32, #tpu.memory_space<vmem>>, vector<1x8xf32>
    %27 = vector.broadcast %26 : vector<1x8xf32> to vector<64x8xf32>
    %28 = arith.addf %25, %27 : vector<64x8xf32>
    %c0_17 = arith.constant 0 : index
    %c0_18 = arith.constant 0 : index
    %29 = vector.load %arg8[%c0_17, %c0_18] : memref<64x8xf32, #tpu.memory_space<vmem>>, vector<64x8xf32>
    tpu.vector_store %arg8[%c0_17, %c0_18], %28 {strides = array<i32>} : memref<64x8xf32, #tpu.memory_space<vmem>>, vector<64x8xf32>,
    return
  }
  func.func @transform_0(%arg0: i32) -> (i32, i32) {
    %c0_i32 = arith.constant 0 : i32
    %c0_i32_0 = arith.constant 0 : i32
    return %arg0, %c0_i32 : i32, i32
  }
  func.func @transform_1(%arg0: i32) -> (i32, i32) {
    %c0_i32 = arith.constant 0 : i32
    %c0_i32_0 = arith.constant 0 : i32
    %c0_i32_1 = arith.constant 0 : i32
    return %c0_i32, %c0_i32_0 : i32, i32
  }
  func.func @transform_2(%arg0: i32) -> (i32, i32) {
    %c0_i32 = arith.constant 0 : i32
    %c0_i32_0 = arith.constant 0 : i32
    %c0_i32_1 = arith.constant 0 : i32
    return %c0_i32, %c0_i32_0 : i32, i32
  }
  func.func @transform_3(%arg0: i32) -> (i32, i32) {
    %c0_i32 = arith.constant 0 : i32
    %c0_i32_0 = arith.constant 0 : i32
    %c0_i32_1 = arith.constant 0 : i32
    return %c0_i32, %c0_i32_0 : i32, i32
  }
  func.func @transform_4(%arg0: i32) -> (i32, i32) {
    %c0_i32 = arith.constant 0 : i32
    %c0_i32_0 = arith.constant 0 : i32
    %c0_i32_1 = arith.constant 0 : i32
    return %c0_i32, %c0_i32_0 : i32, i32
  }
  func.func @transform_5(%arg0: i32) -> (i32, i32) {
    %c0_i32 = arith.constant 0 : i32
    %c0_i32_0 = arith.constant 0 : i32
    %c0_i32_1 = arith.constant 0 : i32
    return %c0_i32, %c0_i32_0 : i32, i32
  }
  func.func @transform_6(%arg0: i32) -> (i32, i32) {
    %c0_i32 = arith.constant 0 : i32
    %c0_i32_0 = arith.constant 0 : i32
    %c0_i32_1 = arith.constant 0 : i32
    return %c0_i32, %c0_i32_0 : i32, i32
  }
  func.func @transform_7(%arg0: i32) -> (i32, i32) {
    %c0_i32 = arith.constant 0 : i32
    %c0_i32_0 = arith.constant 0 : i32
    return %arg0, %c0_i32 : i32, i32
  }
}

</mosaic_0001>

<llo_original>
// kernel: tpu_custom_call.1
$region0: #{tpu_custom_call.1}
  #allocation0 [shape = 'u32[]', space=smem, size = 0x4, offset = 0x4, fixed_abs, tag = 'smem constant byte address 0x4 - core index']
  #allocation1 [shape = 'u32[72,128]{1,0:T(1,128)}', space=vmem, size = 0x9000, scoped, tag = 'internal scratch']
  %s0 = inlined_call_operand.vmem [shape: f32[64,32], index: 0, kind: input, shape index: {}]
  %s1 = inlined_call_operand.vmem [shape: bf16[32,128], index: 1, kind: input, shape index: {}]
  %s2 = inlined_call_operand.vmem [shape: f32[1,128], index: 2, kind: input, shape index: {}]
  %s3 = inlined_call_operand.vmem [shape: bf16[128,128], index: 3, kind: input, shape index: {}]
  %s4 = inlined_call_operand.vmem [shape: f32[1,128], index: 4, kind: input, shape index: {}]
  %s5 = inlined_call_operand.vmem [shape: bf16[128,8], index: 5, kind: input, shape index: {}]
  %s6 = inlined_call_operand.vmem [shape: f32[1,8], index: 6, kind: input, shape index: {}]
  %s7 = inlined_call_operand.vmem [shape: f32[64,8], index: 7, kind: output, shape index: {}]
  %s8 = sld [smem:[#allocation0]]
  $region38: #{tpu_custom_call.1} parent=0
    _
  %s10 = ssub.s32 1, %s8
  %s11 = scalar_select 0, %s10, %s8
  // Predicated region
  $region2: #{tpu_custom_call.1} parent=0 // pred_check
    _
  $region3: #{tpu_custom_call.1} parent=0 // pred_check_branch
    %13 = sbr.rel (0) target = $region5
  $region4: #{tpu_custom_call.1} parent=0 // pred_region
    _
  $region5: #{tpu_custom_call.1} parent=0 // pred_fallthru
    _
  // Predicated region
  $region6: #{tpu_custom_call.1} parent=0 // pred_check
    _
  $region7: #{tpu_custom_call.1} parent=0 // pred_check_branch
    %15 = sbr.rel (0) target = $region9
  $region8: #{tpu_custom_call.1} parent=0 // pred_region
    _
  $region9: #{tpu_custom_call.1} parent=0 // pred_fallthru
    _
  // Predicated region
  $region10: #{tpu_custom_call.1} parent=0 // pred_check
    _
  $region11: #{tpu_custom_call.1} parent=0 // pred_check_branch
    %17 = sbr.rel (0) target = $region13
  $region12: #{tpu_custom_call.1} parent=0 // pred_region
    _
  $region13: #{tpu_custom_call.1} parent=0 // pred_fallthru
    _
  // Predicated region
  $region14: #{tpu_custom_call.1} parent=0 // pred_check
    _
  $region15: #{tpu_custom_call.1} parent=0 // pred_check_branch
    %19 = sbr.rel (0) target = $region17
  $region16: #{tpu_custom_call.1} parent=0 // pred_region
    _
  $region17: #{tpu_custom_call.1} parent=0 // pred_fallthru
    _
  // Predicated region
  $region18: #{tpu_custom_call.1} parent=0 // pred_check
    _
  $region19: #{tpu_custom_call.1} parent=0 // pred_check_branch
    %21 = sbr.rel (0) target = $region21
  $region20: #{tpu_custom_call.1} parent=0 // pred_region
    _
  $region21: #{tpu_custom_call.1} parent=0 // pred_fallthru
    _
  // Predicated region
  $region22: #{tpu_custom_call.1} parent=0 // pred_check
    _
  $region23: #{tpu_custom_call.1} parent=0 // pred_check_branch
    %23 = sbr.rel (0) target = $region25
  $region24: #{tpu_custom_call.1} parent=0 // pred_region
    _
  $region25: #{tpu_custom_call.1} parent=0 // pred_fallthru
    _
  // Predicated region
  $region26: #{tpu_custom_call.1} parent=0 // pred_check
    _
  $region27: #{tpu_custom_call.1} parent=0 // pred_check_branch
    %25 = sbr.rel (0) target = $region29
  $region28: #{tpu_custom_call.1} parent=0 // pred_region
    _
  $region29: #{tpu_custom_call.1} parent=0 // pred_fallthru
    _
  %v27 = vld [vmem:[%s0] sm:$0xff]
  %v28 = vld [vmem:[%s0 + $0x8] sm:$0xff]
  %v29 = vld [vmem:[%s0 + $0x10] sm:$0xff]
  %v30 = vld [vmem:[%s0 + $0x18] sm:$0xff]
  %v31 = vld [vmem:[%s0 + $0x20] sm:$0xff]
  %v32 = vld [vmem:[%s0 + $0x28] sm:$0xff]
  %v33 = vld [vmem:[%s0 + $0x30] sm:$0xff]
  %v34 = vld [vmem:[%s0 + $0x38] sm:$0xff]
  %v35 = vpack.c.bf16 %v28, %v27
  %v36 = vpack.c.bf16 %v30, %v29
  %v37 = vpack.c.bf16 %v32, %v31
  %v38 = vpack.c.bf16 %v34, %v33
  %v39 = vld [vmem:[%s1] sm:$0xf]
  %v40 = vld [vmem:[%s1 + $0x4] sm:$0xf]
  %v41 = vld [vmem:[%s1 + $0x8] sm:$0xf]
  %v42 = vld [vmem:[%s1 + $0xc] sm:$0xf]
  %v43 = vld [vmem:[%s2] sm:$0x1]
  %v45 = vperm.slane %v43, 0
  %v51 = vunpack.c.l.b16 %v39
  %v52 = vunpack.c.l.b16 %v40
  %v53 = vunpack.c.l.b16 %v41
  %v54 = vunpack.c.l.b16 %v42
  %v55 = vpack.c.b16 %v52, %v51
  %v56 = vpack.c.b16 %v54, %v53
  %vm59 = vcmask 261120
  %v61 = vsel %vm59, %v35, 0
  %v64 = vsel %vm59, %v36, 0
  %v67 = vsel %vm59, %v37, 0
  %v70 = vsel %vm59, %v38, 0
  %72 = vmatpush.bf16.msra.mxu0 0
  %73 = vmatpush.bf16.msra.mxu0 0
  %74 = vmatpush.bf16.msra.mxu0 0
  %75 = vmatpush.bf16.msra.mxu0 0
  %76 = vmatpush.bf16.msra.mxu0 0
  %77 = vmatpush.bf16.msra.mxu0 0
  %78 = vmatpush.bf16.msra.mxu0 %v56
  %79 = vmatpush.bf16.msra.mxu0 %v55
  %80 = vmatmul.bf16.gmra.mxu0 %v61
  %v81 = vpop.f32.mrf.mxu0
  %v82 = vadd.f32 %v45, %v81
  %v83 = vpop.f32.mrf.mxu0
  %v84 = vadd.f32 %v45, %v83
  %85 = vmatmul.bf16.gmra.mxu0 %v64
  %v86 = vpop.f32.mrf.mxu0
  %v87 = vadd.f32 %v45, %v86
  %v88 = vpop.f32.mrf.mxu0
  %v89 = vadd.f32 %v45, %v88
  %90 = vmatmul.bf16.gmra.mxu0 %v67
  %v91 = vpop.f32.mrf.mxu0
  %v92 = vadd.f32 %v45, %v91
  %v93 = vpop.f32.mrf.mxu0
  %v94 = vadd.f32 %v45, %v93
  %95 = vmatmul.bf16.gmra.mxu0 %v70
  %v96 = vpop.f32.mrf.mxu0
  %v97 = vadd.f32 %v45, %v96
  %v98 = vpop.f32.mrf.mxu0
  %v99 = vadd.f32 %v45, %v98
  %100 = vdwg.mxu0
  %v101 = vxor.u32 %v82, 2147483648
  %v102 = vxor.u32 %v84, 2147483648
  %v103 = vxor.u32 %v87, 2147483648
  %v104 = vxor.u32 %v89, 2147483648
  %v105 = vxor.u32 %v92, 2147483648
  %v106 = vxor.u32 %v94, 2147483648
  %v107 = vxor.u32 %v97, 2147483648
  %v108 = vxor.u32 %v99, 2147483648
  %v109 = vmul.f32 %v101, 1.442695
  %v110 = vpow.pop %v109
  %v111 = vmul.f32 %v102, 1.442695
  %v112 = vpow.pop %v111
  %v113 = vmul.f32 %v103, 1.442695
  %v114 = vpow.pop %v113
  %v115 = vmul.f32 %v104, 1.442695
  %v116 = vpow.pop %v115
  %v117 = vmul.f32 %v105, 1.442695
  %v118 = vpow.pop %v117
  %v119 = vmul.f32 %v106, 1.442695
  %v120 = vpow.pop %v119
  %v121 = vmul.f32 %v107, 1.442695
  %v122 = vpow.pop %v121
  %v123 = vmul.f32 %v108, 1.442695
  %v124 = vpow.pop %v123
  %v125 = vadd.f32 %v110, 1.0
  %v126 = vadd.f32 %v112, 1.0
  %v127 = vadd.f32 %v114, 1.0
  %v128 = vadd.f32 %v116, 1.0
  %v129 = vadd.f32 %v118, 1.0
  %v130 = vadd.f32 %v120, 1.0
  %v131 = vadd.f32 %v122, 1.0
  %v132 = vadd.f32 %v124, 1.0
  %v133 = vrcp.pop %v125
  %v134 = vmul.f32 %v125, %v133
  %v135 = vsub.f32 1.0, %v134
  %v136 = vmul.f32 %v133, %v135
  %v137 = vadd.f32 %v133, %v136
  %vm138 = vweird.f32 %v125
  %vm139 = vweird.f32 %v133
  %vm140 = vmor %vm138, %vm139
  %v141 = vsel %vm140, %v133, %v137
  %v142 = vand.u32 2147483647, %v125
  %vm143 = vcmp.eq.f32.partialorder %v142, 8.507059e+37
  %v144 = vand.u32 %v125, 2147483648
  %v145 = vor.u32 1.1754944e-38, %v144
  %v146 = vsel %vm143, %v145, %v141
  %v147 = vmul.f32 1.0, %v146
  %v148 = vrcp.pop %v126
  %v149 = vmul.f32 %v126, %v148
  %v150 = vsub.f32 1.0, %v149
  %v151 = vmul.f32 %v148, %v150
  %v152 = vadd.f32 %v148, %v151
  %vm153 = vweird.f32 %v126
  %vm154 = vweird.f32 %v148
  %vm155 = vmor %vm153, %vm154
  %v156 = vsel %vm155, %v148, %v152
  %v157 = vand.u32 2147483647, %v126
  %vm158 = vcmp.eq.f32.partialorder %v157, 8.507059e+37
  %v159 = vand.u32 %v126, 2147483648
  %v160 = vor.u32 1.1754944e-38, %v159
  %v161 = vsel %vm158, %v160, %v156
  %v162 = vmul.f32 1.0, %v161
  %v163 = vrcp.pop %v127
  %v164 = vmul.f32 %v127, %v163
  %v165 = vsub.f32 1.0, %v164
  %v166 = vmul.f32 %v163, %v165
  %v167 = vadd.f32 %v163, %v166
  %vm168 = vweird.f32 %v127
  %vm169 = vweird.f32 %v163
  %vm170 = vmor %vm168, %vm169
  %v171 = vsel %vm170, %v163, %v167
  %v172 = vand.u32 2147483647, %v127
  %vm173 = vcmp.eq.f32.partialorder %v172, 8.507059e+37
  %v174 = vand.u32 %v127, 2147483648
  %v175 = vor.u32 1.1754944e-38, %v174
  %v176 = vsel %vm173, %v175, %v171
  %v177 = vmul.f32 1.0, %v176
  %v178 = vrcp.pop %v128
  %v179 = vmul.f32 %v128, %v178
  %v180 = vsub.f32 1.0, %v179
  %v181 = vmul.f32 %v178, %v180
  %v182 = vadd.f32 %v178, %v181
  %vm183 = vweird.f32 %v128
  %vm184 = vweird.f32 %v178
  %vm185 = vmor %vm183, %vm184
  %v186 = vsel %vm185, %v178, %v182
  %v187 = vand.u32 2147483647, %v128
  %vm188 = vcmp.eq.f32.partialorder %v187, 8.507059e+37
  %v189 = vand.u32 %v128, 2147483648
  %v190 = vor.u32 1.1754944e-38, %v189
  %v191 = vsel %vm188, %v190, %v186
  %v192 = vmul.f32 1.0, %v191
  %v193 = vrcp.pop %v129
  %v194 = vmul.f32 %v129, %v193
  %v195 = vsub.f32 1.0, %v194
  %v196 = vmul.f32 %v193, %v195
  %v197 = vadd.f32 %v193, %v196
  %vm198 = vweird.f32 %v129
  %vm199 = vweird.f32 %v193
  %vm200 = vmor %vm198, %vm199
  %v201 = vsel %vm200, %v193, %v197
  %v202 = vand.u32 2147483647, %v129
  %vm203 = vcmp.eq.f32.partialorder %v202, 8.507059e+37
  %v204 = vand.u32 %v129, 2147483648
  %v205 = vor.u32 1.1754944e-38, %v204
  %v206 = vsel %vm203, %v205, %v201
  %v207 = vmul.f32 1.0, %v206
  %v208 = vrcp.pop %v130
  %v209 = vmul.f32 %v130, %v208
  %v210 = vsub.f32 1.0, %v209
  %v211 = vmul.f32 %v208, %v210
  %v212 = vadd.f32 %v208, %v211
  %vm213 = vweird.f32 %v130
  %vm214 = vweird.f32 %v208
  %vm215 = vmor %vm213, %vm214
  %v216 = vsel %vm215, %v208, %v212
  %v217 = vand.u32 2147483647, %v130
  %vm218 = vcmp.eq.f32.partialorder %v217, 8.507059e+37
  %v219 = vand.u32 %v130, 2147483648
  %v220 = vor.u32 1.1754944e-38, %v219
  %v221 = vsel %vm218, %v220, %v216
  %v222 = vmul.f32 1.0, %v221
  %v223 = vrcp.pop %v131
  %v224 = vmul.f32 %v131, %v223
  %v225 = vsub.f32 1.0, %v224
  %v226 = vmul.f32 %v223, %v225
  %v227 = vadd.f32 %v223, %v226
  %vm228 = vweird.f32 %v131
  %vm229 = vweird.f32 %v223
  %vm230 = vmor %vm228, %vm229
  %v231 = vsel %vm230, %v223, %v227
  %v232 = vand.u32 2147483647, %v131
  %vm233 = vcmp.eq.f32.partialorder %v232, 8.507059e+37
  %v234 = vand.u32 %v131, 2147483648
  %v235 = vor.u32 1.1754944e-38, %v234
  %v236 = vsel %vm233, %v235, %v231
  %v237 = vmul.f32 1.0, %v236
  %v238 = vrcp.pop %v132
  %v239 = vmul.f32 %v132, %v238
  %v240 = vsub.f32 1.0, %v239
  %v241 = vmul.f32 %v238, %v240
  %v242 = vadd.f32 %v238, %v241
  %vm243 = vweird.f32 %v132
  %vm244 = vweird.f32 %v238
  %vm245 = vmor %vm243, %vm244
  %v246 = vsel %vm245, %v238, %v242
  %v247 = vand.u32 2147483647, %v132
  %vm248 = vcmp.eq.f32.partialorder %v247, 8.507059e+37
  %v249 = vand.u32 %v132, 2147483648
  %v250 = vor.u32 1.1754944e-38, %v249
  %v251 = vsel %vm248, %v250, %v246
  %v252 = vmul.f32 1.0, %v251
  %v253 = vpack.c.bf16 %v162, %v147
  %v254 = vpack.c.bf16 %v192, %v177
  %v255 = vpack.c.bf16 %v222, %v207
  %v256 = vpack.c.bf16 %v252, %v237
  %v257 = vld [vmem:[%s3] sm:$0xf]
  %v258 = vld [vmem:[%s3 + $0x4] sm:$0xf]
  %v259 = vld [vmem:[%s3 + $0x8] sm:$0xf]
  %v260 = vld [vmem:[%s3 + $0xc] sm:$0xf]
  %v261 = vld [vmem:[%s3 + $0x10] sm:$0xf]
  %v262 = vld [vmem:[%s3 + $0x14] sm:$0xf]
  %v263 = vld [vmem:[%s3 + $0x18] sm:$0xf]
  %v264 = vld [vmem:[%s3 + $0x1c] sm:$0xf]
  %v265 = vld [vmem:[%s3 + $0x20] sm:$0xf]
  %v266 = vld [vmem:[%s3 + $0x24] sm:$0xf]
  %v267 = vld [vmem:[%s3 + $0x28] sm:$0xf]
  %v268 = vld [vmem:[%s3 + $0x2c] sm:$0xf]
  %v269 = vld [vmem:[%s3 + $0x30] sm:$0xf]
  %v270 = vld [vmem:[%s3 + $0x34] sm:$0xf]
  %v271 = vld [vmem:[%s3 + $0x38] sm:$0xf]
  %v272 = vld [vmem:[%s3 + $0x3c] sm:$0xf]
  %v273 = vld [vmem:[%s4] sm:$0x1]
  %v275 = vperm.slane %v273, 0
  %v293 = vunpack.c.l.b16 %v257
  %v294 = vunpack.c.l.b16 %v258
  %v295 = vunpack.c.l.b16 %v259
  %v296 = vunpack.c.l.b16 %v260
  %v297 = vunpack.c.l.b16 %v261
  %v298 = vunpack.c.l.b16 %v262
  %v299 = vunpack.c.l.b16 %v263
  %v300 = vunpack.c.l.b16 %v264
  %v301 = vunpack.c.l.b16 %v265
  %v302 = vunpack.c.l.b16 %v266
  %v303 = vunpack.c.l.b16 %v267
  %v304 = vunpack.c.l.b16 %v268
  %v305 = vunpack.c.l.b16 %v269
  %v306 = vunpack.c.l.b16 %v270
  %v307 = vunpack.c.l.b16 %v271
  %v308 = vunpack.c.l.b16 %v272
  %v309 = vpack.c.b16 %v294, %v293
  %v310 = vpack.c.b16 %v296, %v295
  %v311 = vpack.c.b16 %v298, %v297
  %v312 = vpack.c.b16 %v300, %v299
  %v313 = vpack.c.b16 %v302, %v301
  %v314 = vpack.c.b16 %v304, %v303
  %v315 = vpack.c.b16 %v306, %v305
  %v316 = vpack.c.b16 %v308, %v307
  %325 = vmatpush.bf16.msra.mxu0 %v316
  %326 = vmatpush.bf16.msra.mxu0 %v315
  %327 = vmatpush.bf16.msra.mxu0 %v314
  %328 = vmatpush.bf16.msra.mxu0 %v313
  %329 = vmatpush.bf16.msra.mxu0 %v312
  %330 = vmatpush.bf16.msra.mxu0 %v311
  %331 = vmatpush.bf16.msra.mxu0 %v310
  %332 = vmatpush.bf16.msra.mxu0 %v309
  %333 = vmatmul.bf16.gmra.mxu0 %v253
  %v334 = vpop.f32.mrf.mxu0
  %v335 = vadd.f32 %v275, %v334
  %v336 = vpop.f32.mrf.mxu0
  %v337 = vadd.f32 %v275, %v336
  %338 = vmatmul.bf16.gmra.mxu0 %v254
  %v339 = vpop.f32.mrf.mxu0
  %v340 = vadd.f32 %v275, %v339
  %v341 = vpop.f32.mrf.mxu0
  %v342 = vadd.f32 %v275, %v341
  %343 = vmatmul.bf16.gmra.mxu0 %v255
  %v344 = vpop.f32.mrf.mxu0
  %v345 = vadd.f32 %v275, %v344
  %v346 = vpop.f32.mrf.mxu0
  %v347 = vadd.f32 %v275, %v346
  %348 = vmatmul.bf16.gmra.mxu0 %v256
  %v349 = vpop.f32.mrf.mxu0
  %v350 = vadd.f32 %v275, %v349
  %v351 = vpop.f32.mrf.mxu0
  %v352 = vadd.f32 %v275, %v351
  %353 = vdwg.mxu0
  %v354 = vxor.u32 %v335, 2147483648
  %v355 = vxor.u32 %v337, 2147483648
  %v356 = vxor.u32 %v340, 2147483648
  %v357 = vxor.u32 %v342, 2147483648
  %v358 = vxor.u32 %v345, 2147483648
  %v359 = vxor.u32 %v347, 2147483648
  %v360 = vxor.u32 %v350, 2147483648
  %v361 = vxor.u32 %v352, 2147483648
  %v362 = vmul.f32 %v354, 1.442695
  %v363 = vpow.pop %v362
  %v364 = vmul.f32 %v355, 1.442695
  %v365 = vpow.pop %v364
  %v366 = vmul.f32 %v356, 1.442695
  %v367 = vpow.pop %v366
  %v368 = vmul.f32 %v357, 1.442695
  %v369 = vpow.pop %v368
  %v370 = vmul.f32 %v358, 1.442695
  %v371 = vpow.pop %v370
  %v372 = vmul.f32 %v359, 1.442695
  %v373 = vpow.pop %v372
  %v374 = vmul.f32 %v360, 1.442695
  %v375 = vpow.pop %v374
  %v376 = vmul.f32 %v361, 1.442695
  %v377 = vpow.pop %v376
  %v378 = vadd.f32 %v363, 1.0
  %v379 = vadd.f32 %v365, 1.0
  %v380 = vadd.f32 %v367, 1.0
  %v381 = vadd.f32 %v369, 1.0
  %v382 = vadd.f32 %v371, 1.0
  %v383 = vadd.f32 %v373, 1.0
  %v384 = vadd.f32 %v375, 1.0
  %v385 = vadd.f32 %v377, 1.0
  %v386 = vrcp.pop %v378
  %v387 = vmul.f32 %v378, %v386
  %v388 = vsub.f32 1.0, %v387
  %v389 = vmul.f32 %v386, %v388
  %v390 = vadd.f32 %v386, %v389
  %vm391 = vweird.f32 %v378
  %vm392 = vweird.f32 %v386
  %vm393 = vmor %vm391, %vm392
  %v394 = vsel %vm393, %v386, %v390
  %v395 = vand.u32 2147483647, %v378
  %vm396 = vcmp.eq.f32.partialorder %v395, 8.507059e+37
  %v397 = vand.u32 %v378, 2147483648
  %v398 = vor.u32 1.1754944e-38, %v397
  %v399 = vsel %vm396, %v398, %v394
  %v400 = vmul.f32 1.0, %v399
  %v401 = vrcp.pop %v379
  %v402 = vmul.f32 %v379, %v401
  %v403 = vsub.f32 1.0, %v402
  %v404 = vmul.f32 %v401, %v403
  %v405 = vadd.f32 %v401, %v404
  %vm406 = vweird.f32 %v379
  %vm407 = vweird.f32 %v401
  %vm408 = vmor %vm406, %vm407
  %v409 = vsel %vm408, %v401, %v405
  %v410 = vand.u32 2147483647, %v379
  %vm411 = vcmp.eq.f32.partialorder %v410, 8.507059e+37
  %v412 = vand.u32 %v379, 2147483648
  %v413 = vor.u32 1.1754944e-38, %v412
  %v414 = vsel %vm411, %v413, %v409
  %v415 = vmul.f32 1.0, %v414
  %v416 = vrcp.pop %v380
  %v417 = vmul.f32 %v380, %v416
  %v418 = vsub.f32 1.0, %v417
  %v419 = vmul.f32 %v416, %v418
  %v420 = vadd.f32 %v416, %v419
  %vm421 = vweird.f32 %v380
  %vm422 = vweird.f32 %v416
  %vm423 = vmor %vm421, %vm422
  %v424 = vsel %vm423, %v416, %v420
  %v425 = vand.u32 2147483647, %v380
  %vm426 = vcmp.eq.f32.partialorder %v425, 8.507059e+37
  %v427 = vand.u32 %v380, 2147483648
  %v428 = vor.u32 1.1754944e-38, %v427
  %v429 = vsel %vm426, %v428, %v424
  %v430 = vmul.f32 1.0, %v429
  %v431 = vrcp.pop %v381
  %v432 = vmul.f32 %v381, %v431
  %v433 = vsub.f32 1.0, %v432
  %v434 = vmul.f32 %v431, %v433
  %v435 = vadd.f32 %v431, %v434
  %vm436 = vweird.f32 %v381
  %vm437 = vweird.f32 %v431
  %vm438 = vmor %vm436, %vm437
  %v439 = vsel %vm438, %v431, %v435
  %v440 = vand.u32 2147483647, %v381
  %vm441 = vcmp.eq.f32.partialorder %v440, 8.507059e+37
  %v442 = vand.u32 %v381, 2147483648
  %v443 = vor.u32 1.1754944e-38, %v442
  %v444 = vsel %vm441, %v443, %v439
  %v445 = vmul.f32 1.0, %v444
  %v446 = vrcp.pop %v382
  %v447 = vmul.f32 %v382, %v446
  %v448 = vsub.f32 1.0, %v447
  %v449 = vmul.f32 %v446, %v448
  %v450 = vadd.f32 %v446, %v449
  %vm451 = vweird.f32 %v382
  %vm452 = vweird.f32 %v446
  %vm453 = vmor %vm451, %vm452
  %v454 = vsel %vm453, %v446, %v450
  %v455 = vand.u32 2147483647, %v382
  %vm456 = vcmp.eq.f32.partialorder %v455, 8.507059e+37
  %v457 = vand.u32 %v382, 2147483648
  %v458 = vor.u32 1.1754944e-38, %v457
  %v459 = vsel %vm456, %v458, %v454
  %v460 = vmul.f32 1.0, %v459
  %v461 = vrcp.pop %v383
  %v462 = vmul.f32 %v383, %v461
  %v463 = vsub.f32 1.0, %v462
  %v464 = vmul.f32 %v461, %v463
  %v465 = vadd.f32 %v461, %v464
  %vm466 = vweird.f32 %v383
  %vm467 = vweird.f32 %v461
  %vm468 = vmor %vm466, %vm467
  %v469 = vsel %vm468, %v461, %v465
  %v470 = vand.u32 2147483647, %v383
  %vm471 = vcmp.eq.f32.partialorder %v470, 8.507059e+37
  %v472 = vand.u32 %v383, 2147483648
  %v473 = vor.u32 1.1754944e-38, %v472
  %v474 = vsel %vm471, %v473, %v469
  %v475 = vmul.f32 1.0, %v474
  %v476 = vrcp.pop %v384
  %v477 = vmul.f32 %v384, %v476
  %v478 = vsub.f32 1.0, %v477
  %v479 = vmul.f32 %v476, %v478
  %v480 = vadd.f32 %v476, %v479
  %vm481 = vweird.f32 %v384
  %vm482 = vweird.f32 %v476
  %vm483 = vmor %vm481, %vm482
  %v484 = vsel %vm483, %v476, %v480
  %v485 = vand.u32 2147483647, %v384
  %vm486 = vcmp.eq.f32.partialorder %v485, 8.507059e+37
  %v487 = vand.u32 %v384, 2147483648
  %v488 = vor.u32 1.1754944e-38, %v487
  %v489 = vsel %vm486, %v488, %v484
  %v490 = vmul.f32 1.0, %v489
  %v491 = vrcp.pop %v385
  %v492 = vmul.f32 %v385, %v491
  %v493 = vsub.f32 1.0, %v492
  %v494 = vmul.f32 %v491, %v493
  %v495 = vadd.f32 %v491, %v494
  %vm496 = vweird.f32 %v385
  %vm497 = vweird.f32 %v491
  %vm498 = vmor %vm496, %vm497
  %v499 = vsel %vm498, %v491, %v495
  %v500 = vand.u32 2147483647, %v385
  %vm501 = vcmp.eq.f32.partialorder %v500, 8.507059e+37
  %v502 = vand.u32 %v385, 2147483648
  %v503 = vor.u32 1.1754944e-38, %v502
  %v504 = vsel %vm501, %v503, %v499
  %v505 = vmul.f32 1.0, %v504
  %v506 = vpack.c.bf16 %v415, %v400
  %v507 = vpack.c.bf16 %v445, %v430
  %v508 = vpack.c.bf16 %v475, %v460
  %v509 = vpack.c.bf16 %v505, %v490
  %v510 = vld [vmem:[%s5] sm:$0xf]
  %v511 = vld [vmem:[%s5 + $0x4] sm:$0xf]
  %v512 = vld [vmem:[%s5 + $0x8] sm:$0xf]
  %v513 = vld [vmem:[%s5 + $0xc] sm:$0xf]
  %v514 = vld [vmem:[%s5 + $0x10] sm:$0xf]
  %v515 = vld [vmem:[%s5 + $0x14] sm:$0xf]
  %v516 = vld [vmem:[%s5 + $0x18] sm:$0xf]
  %v517 = vld [vmem:[%s5 + $0x1c] sm:$0xf]
  %v518 = vld [vmem:[%s5 + $0x20] sm:$0xf]
  %v519 = vld [vmem:[%s5 + $0x24] sm:$0xf]
  %v520 = vld [vmem:[%s5 + $0x28] sm:$0xf]
  %v521 = vld [vmem:[%s5 + $0x2c] sm:$0xf]
  %v522 = vld [vmem:[%s5 + $0x30] sm:$0xf]
  %v523 = vld [vmem:[%s5 + $0x34] sm:$0xf]
  %v524 = vld [vmem:[%s5 + $0x38] sm:$0xf]
  %v525 = vld [vmem:[%s5 + $0x3c] sm:$0xf]
  %v526 = vld [vmem:[%s6] sm:$0x1]
  %v528 = vperm.slane %v526, 0
  %v546 = vunpack.c.l.b16 %v510
  %v547 = vunpack.c.l.b16 %v511
  %v548 = vunpack.c.l.b16 %v512
  %v549 = vunpack.c.l.b16 %v513
  %v550 = vunpack.c.l.b16 %v514
  %v551 = vunpack.c.l.b16 %v515
  %v552 = vunpack.c.l.b16 %v516
  %v553 = vunpack.c.l.b16 %v517
  %v554 = vunpack.c.l.b16 %v518
  %v555 = vunpack.c.l.b16 %v519
  %v556 = vunpack.c.l.b16 %v520
  %v557 = vunpack.c.l.b16 %v521
  %v558 = vunpack.c.l.b16 %v522
  %v559 = vunpack.c.l.b16 %v523
  %v560 = vunpack.c.l.b16 %v524
  %v561 = vunpack.c.l.b16 %v525
  %v562 = vpack.c.b16 %v547, %v546
  %v563 = vpack.c.b16 %v549, %v548
  %v564 = vpack.c.b16 %v551, %v550
  %v565 = vpack.c.b16 %v553, %v552
  %v566 = vpack.c.b16 %v555, %v554
  %v567 = vpack.c.b16 %v557, %v556
  %v568 = vpack.c.b16 %v559, %v558
  %v569 = vpack.c.b16 %v561, %v560
  %578 = vmatpush.bf16.msra.mxu0 %v569
  %579 = vmatpush.bf16.msra.mxu0 %v568
  %580 = vmatpush.bf16.msra.mxu0 %v567
  %581 = vmatpush.bf16.msra.mxu0 %v566
  %582 = vmatpush.bf16.msra.mxu0 %v565
  %583 = vmatpush.bf16.msra.mxu0 %v564
  %584 = vmatpush.bf16.msra.mxu0 %v563
  %585 = vmatpush.bf16.msra.mxu0 %v562
  %586 = vmatmul.bf16.gmra.mxu0 %v506
  %v587 = vpop.f32.mrf.mxu0
  %v588 = vadd.f32 %v528, %v587
  %v589 = vpop.f32.mrf.mxu0
  %v590 = vadd.f32 %v528, %v589
  %591 = vmatmul.bf16.gmra.mxu0 %v507
  %v592 = vpop.f32.mrf.mxu0
  %v593 = vadd.f32 %v528, %v592
  %v594 = vpop.f32.mrf.mxu0
  %v595 = vadd.f32 %v528, %v594
  %596 = vmatmul.bf16.gmra.mxu0 %v508
  %v597 = vpop.f32.mrf.mxu0
  %v598 = vadd.f32 %v528, %v597
  %v599 = vpop.f32.mrf.mxu0
  %v600 = vadd.f32 %v528, %v599
  %601 = vmatmul.bf16.gmra.mxu0 %v509
  %v602 = vpop.f32.mrf.mxu0
  %v603 = vadd.f32 %v528, %v602
  %v604 = vpop.f32.mrf.mxu0
  %v605 = vadd.f32 %v528, %v604
  %606 = vdwg.mxu0
  %vm607 = vcmask 64512
  %608 = vst.msk [vmem:[%s7] sm:$0xff] %vm607, %v588
  %609 = vst.msk [vmem:[%s7 + $0x8] sm:$0xff] %vm607, %v590
  %610 = vst.msk [vmem:[%s7 + $0x10] sm:$0xff] %vm607, %v593
  %611 = vst.msk [vmem:[%s7 + $0x18] sm:$0xff] %vm607, %v595
  %612 = vst.msk [vmem:[%s7 + $0x20] sm:$0xff] %vm607, %v598
  %613 = vst.msk [vmem:[%s7 + $0x28] sm:$0xff] %vm607, %v600
  %614 = vst.msk [vmem:[%s7 + $0x30] sm:$0xff] %vm607, %v603
  %615 = vst.msk [vmem:[%s7 + $0x38] sm:$0xff] %vm607, %v605
  // Predicated region
  $region30: #{tpu_custom_call.1} parent=0 // pred_check
    _
  $region31: #{tpu_custom_call.1} parent=0 // pred_check_branch
    %617 = sbr.rel (0) target = $region33
  $region32: #{tpu_custom_call.1} parent=0 // pred_region
    _
  $region33: #{tpu_custom_call.1} parent=0 // pred_fallthru
    _
  // Predicated region
  $region34: #{tpu_custom_call.1} parent=0 // pred_check
    _
  $region35: #{tpu_custom_call.1} parent=0 // pred_check_branch
    %619 = sbr.rel (0) target = $region37
  $region36: #{tpu_custom_call.1} parent=0 // pred_region
    _
  $region37: #{tpu_custom_call.1} parent=0 // pred_fallthru
    _

</llo_original>
